<compile_context>
chip_gen: v6e
topology: v6e:2x2x1
jax: 0.10.0
libtpu: 0.0.40
codegen_flags: <defaults>
</compile_context>

<pallas_src>
import functools
import math

import jax
import jax.numpy as jnp
from jax import lax
from jax.experimental import pallas as pl
from jax.experimental.pallas import tpu as pltpu

PARAM_DTYPE = jnp.bfloat16
LOG2E = 1.4426950408889634
NEG_INF = -1e30                      # finite mask value (avoids -inf - -inf NaNs)


def _default_vmem_limit():
    try:
        cap = int(pltpu.get_tpu_info().vmem_capacity_bytes)
        # leave ~16 MiB headroom for Mosaic scratch / semaphores; cap at 112 MiB
        return max(32 * 1024 * 1024, min(cap - 16 * 1024 * 1024, 112 * 1024 * 1024))
    except Exception:
        return 48 * 1024 * 1024      # safe on v5e / v6e / v7x


VMEM_LIMIT = _default_vmem_limit()


def _tile(dim, target, aligns=(8,)):
    """Largest tile <= target that divides dim, preferring larger alignments; else full dim."""
    if dim <= target:
        return dim
    for align in aligns:
        t = (min(target, dim) // align) * align
        while t >= align:
            if dim % t == 0:
                return t
            t -= align
    return dim


# ------------------------------------------------------------------
# Tiled linear:  o = x @ w     (weights stored pre-transposed: w is (K, N))
# ------------------------------------------------------------------

def _matmul_kernel(x_ref, w_ref, o_ref, acc_ref):
    @pl.when(pl.program_id(2) == 0)
    def _init():
        acc_ref[...] = jnp.zeros_like(acc_ref)

    # bf16 MXU operands, f32 accumulation; RHS contracts dim 0 (output-lane-major)
    acc_ref[...] += jnp.dot(x_ref[...], w_ref[...],
                            preferred_element_type=jnp.float32)

    @pl.when(pl.program_id(2) == pl.num_programs(2) - 1)
    def _done():
        o_ref[...] = acc_ref[...].astype(o_ref.dtype)


def linear(x, w, *, tm=512, tn=1024, tk=1024, out_dtype=None):
    M, K = x.shape
    K2, N = w.shape
    assert K == K2
    out_dtype = x.dtype if out_dtype is None else out_dtype
    tm = _tile(M, tm, (16, 8))
    tn = _tile(N, tn, (256, 128))
    tk = _tile(K, tk, (256, 128))
    grid = (M // tm, N // tn, K // tk)
    return pl.pallas_call(
        _matmul_kernel,
        out_shape=jax.ShapeDtypeStruct((M, N), out_dtype),
        grid=grid,
        in_specs=[
            pl.BlockSpec((tm, tk), lambda i, j, k: (i, k)),
            pl.BlockSpec((tk, tn), lambda i, j, k: (k, j)),
        ],
        out_specs=pl.BlockSpec((tm, tn), lambda i, j, k: (i, j)),
        scratch_shapes=[pltpu.VMEM((tm, tn), jnp.float32)],
        compiler_params=pltpu.CompilerParams(
            dimension_semantics=("parallel", "parallel", "arbitrary"),
            vmem_limit_bytes=VMEM_LIMIT),
    )(x, w)


# ------------------------------------------------------------------
# Fused residual-add + RMSNorm (row-tiled)
# ------------------------------------------------------------------

def _rmsnorm_kernel(x_ref, w_ref, o_ref, *, eps):
    x = x_ref[...].astype(jnp.float32)
    var = jnp.mean(x * x, axis=-1, keepdims=True)
    inv = lax.rsqrt(var + eps)
    o_ref[...] = (x * inv * w_ref[...].astype(jnp.float32)).astype(o_ref.dtype)


def _skip_rmsnorm_kernel(x_ref, r_ref, w_ref, o_ref, r_out_ref, *, eps):
    x = x_ref[...].astype(jnp.float32) + r_ref[...].astype(jnp.float32)
    r_out_ref[...] = x.astype(r_out_ref.dtype)
    var = jnp.mean(x * x, axis=-1, keepdims=True)
    inv = lax.rsqrt(var + eps)
    o_ref[...] = (x * inv * w_ref[...].astype(jnp.float32)).astype(o_ref.dtype)


def skip_rmsnorm(h, residual, weight, eps, *, tm=1024):
    """Fused residual-add + RMSNorm. Returns (normed, new_residual)."""
    # TODO(synk): fuse the inv-rms scale into the following matmul's LHS to save one
    # (M, H) HBM round trip per norm.
    B, S, H = h.shape
    M = B * S
    x = h.reshape(M, H)
    tm = _tile(M, tm, (16, 8))
    grid = (M // tm,)
    row_spec = pl.BlockSpec((tm, H), lambda i: (i, 0))
    w_spec = pl.BlockSpec((1, H), lambda i: (0, 0))
    cparams = pltpu.CompilerParams(dimension_semantics=("parallel",),
                                   vmem_limit_bytes=VMEM_LIMIT)
    w2d = weight.reshape(1, H)

    if residual is None:
        out = pl.pallas_call(
            functools.partial(_rmsnorm_kernel, eps=eps),
            out_shape=jax.ShapeDtypeStruct((M, H), h.dtype),
            grid=grid,
            in_specs=[row_spec, w_spec],
            out_specs=row_spec,
            compiler_params=cparams,
        )(x, w2d)
        return out.reshape(B, S, H), h

    res = residual.reshape(M, H)
    out, res_out = pl.pallas_call(
        functools.partial(_skip_rmsnorm_kernel, eps=eps),
        out_shape=(jax.ShapeDtypeStruct((M, H), h.dtype),
                   jax.ShapeDtypeStruct((M, H), h.dtype)),
        grid=grid,
        in_specs=[row_spec, row_spec, w_spec],
        out_specs=(row_spec, row_spec),
        compiler_params=cparams,
    )(x, res, w2d)
    return out.reshape(B, S, H), res_out.reshape(B, S, H)


# ------------------------------------------------------------------
# Fused RoPE + relayout to head-major (B, nH + 2*nKV, S, D).
# Q and K heads get RoPE (rotate-half, pre-signed sin table); V heads are copied.
# ------------------------------------------------------------------

def _rope_relayout_kernel(x_ref, cos_ref, sin_ref, o_ref, *, n_rope_heads):
    h = pl.program_id(1)

    @pl.when(h < n_rope_heads)
    def _rope():
        x = x_ref[0].astype(jnp.float32)                   # (ts, D)
        half = x.shape[-1] // 2
        rot = pltpu.roll(x, shift=half, axis=1)            # XLU; positive axis required
        o_ref[0, 0] = (x * cos_ref[0] + rot * sin_ref[0]).astype(o_ref.dtype)

    @pl.when(h >= n_rope_heads)
    def _copy():
        o_ref[0, 0] = x_ref[0]


def rope_and_split_heads(qkv, cos, sin_signed, n_heads, n_kv_heads, head_dim, *, ts=512):
    """qkv: (B, S, (nH+2*nKV)*D) packed q|k|v; cos/sin_signed: (1, S, D) f32.
    Returns head-major (B, nH+2*nKV, S, D) with RoPE applied to Q and K heads."""
    B, S, _ = qkv.shape
    D = head_dim
    NHtot = n_heads + 2 * n_kv_heads
    assert D % 128 == 0, "head_dim must be a multiple of 128 for lane-dense head slicing"
    ts = _tile(S, ts, (16, 8))
    grid = (B, NHtot, S // ts)
    return pl.pallas_call(
        functools.partial(_rope_relayout_kernel, n_rope_heads=n_heads + n_kv_heads),
        out_shape=jax.ShapeDtypeStruct((B, NHtot, S, D), qkv.dtype),
        grid=grid,
        in_specs=[
            pl.BlockSpec((1, ts, D), lambda b, h, si: (b, si, h)),
            pl.BlockSpec((1, ts, D), lambda b, h, si: (0, si, 0)),
            pl.BlockSpec((1, ts, D), lambda b, h, si: (0, si, 0)),
        ],
        out_specs=pl.BlockSpec((1, 1, ts, D), lambda b, h, si: (b, h, si, 0)),
        compiler_params=pltpu.CompilerParams(
            dimension_semantics=("parallel", "parallel", "parallel"),
            vmem_limit_bytes=VMEM_LIMIT),
    )(qkv, cos, sin_signed)


# ------------------------------------------------------------------
# Causal flash attention (exp2 online softmax), one GQA group per invocation.
# RoPE is already applied; K/V tiles are shared by all `group` query heads.
# ------------------------------------------------------------------

def _flash_attn_kernel(q_ref, k_ref, v_ref, o_ref, m_sc, l_sc, acc_sc, *,
                       qk_scale, tq, tkv, group, head_dim):
    qi = pl.program_id(2)
    ki = pl.program_id(3)
    q_start = qi * tq
    kv_start = ki * tkv

    @pl.when(ki == 0)
    def _init():
        m_sc[...] = jnp.full(m_sc.shape, NEG_INF, jnp.float32)
        l_sc[...] = jnp.zeros_like(l_sc)
        acc_sc[...] = jnp.zeros_like(acc_sc)

    # Causal tile skip: only KV tiles intersecting the lower triangle do work.
    @pl.when(kv_start <= q_start + (tq - 1))
    def _compute():
        k = k_ref[0, 0]                                    # (tkv, D) bf16, RoPE applied
        v = v_ref[0, 0]                                    # (tkv, D) bf16
        row = q_start + lax.broadcasted_iota(jnp.int32, (tq, tkv), 0)
        col = kv_start + lax.broadcasted_iota(jnp.int32, (tq, tkv), 1)
        causal = col <= row
        for g in range(group):                             # GQA: reuse resident K/V tile
            q = q_ref[0, g]                                # (tq, D) bf16
            s = lax.dot_general(q, k, (((1,), (1,)), ((), ())),
                                preferred_element_type=jnp.float32) * qk_scale
            s = jnp.where(causal, s, NEG_INF)
            m_prev = m_sc[g]
            m_new = jnp.maximum(m_prev, jnp.max(s, axis=-1, keepdims=True))
            alpha = jnp.exp2(m_prev - m_new)               # qk_scale carries log2(e)
            p = jnp.exp2(s - m_new)
            l_sc[g] = alpha * l_sc[g] + jnp.sum(p, axis=-1, keepdims=True)
            acc_sc[g] = alpha * acc_sc[g] + lax.dot_general(
                p.astype(v.dtype), v, (((1,), (0,)), ((), ())),
                preferred_element_type=jnp.float32)
            m_sc[g] = m_new

    last_ki = (q_start + (tq - 1)) // tkv                  # last KV tile touching this Q tile
    @pl.when(ki == last_ki)
    def _finalize():
        for g in range(group):
            inv_l = pl.reciprocal(l_sc[g], approx=True)
            o_ref[0, :, g * head_dim:(g + 1) * head_dim] = (
                acc_sc[g] * inv_l).astype(o_ref.dtype)


def attention(qkv_hm, n_heads, n_kv_heads, head_dim, qk_scale, *, tq=256, tkv=512):
    """qkv_hm: head-major (B, nH+2*nKV, S, D) with RoPE applied to Q/K.
    Returns (B, S, nH*D)."""
    B, NHtot, S, D = qkv_hm.shape
    nH, nKV = n_heads, n_kv_heads
    assert nH % nKV == 0
    group = nH // nKV
    tq = _tile(S, tq, (16, 8))
    tkv = _tile(S, tkv, (16, 8))
    grid = (B, nKV, S // tq, S // tkv)

    def q_map(b, g, qi, ki):
        return (b, g, qi, 0)                               # head block of size `group`

    def kv_map(head_offset):
        def _map(b, g, qi, ki):
            # Clamp to the last tile the causal mask can touch -> skipped steps reuse
            # the resident block and no redundant K/V DMA is issued.
            kv_idx = jnp.minimum(ki, (qi * tq + tq - 1) // tkv)
            return (b, head_offset + g, kv_idx, 0)
        return _map

    return pl.pallas_call(
        functools.partial(_flash_attn_kernel, qk_scale=qk_scale, tq=tq, tkv=tkv,
                          group=group, head_dim=D),
        out_shape=jax.ShapeDtypeStruct((B, S, nH * D), qkv_hm.dtype),
        grid=grid,
        in_specs=[
            pl.BlockSpec((1, group, tq, D), q_map),                  # Q heads of group g
            pl.BlockSpec((1, 1, tkv, D), kv_map(nH)),                # K head g
            pl.BlockSpec((1, 1, tkv, D), kv_map(nH + nKV)),          # V head g
        ],
        out_specs=pl.BlockSpec((1, tq, group * D), lambda b, g, qi, ki: (b, qi, g)),
        scratch_shapes=[pltpu.VMEM((group, tq, 1), jnp.float32),
                        pltpu.VMEM((group, tq, 1), jnp.float32),
                        pltpu.VMEM((group, tq, D), jnp.float32)],
        compiler_params=pltpu.CompilerParams(
            dimension_semantics=("parallel", "parallel", "parallel", "arbitrary"),
            vmem_limit_bytes=VMEM_LIMIT),
    )(qkv_hm, qkv_hm, qkv_hm)


# ------------------------------------------------------------------
# Fused SwiGLU MLP, tiled over (M rows, I intermediate) with f32 down-proj accumulator
# Weights pre-transposed: wg/wu (H, I), wd (I, H).
# ------------------------------------------------------------------

def _mlp_kernel(x_ref, wg_ref, wu_ref, wd_ref, o_ref, acc_ref):
    j = pl.program_id(1)

    @pl.when(j == 0)
    def _init():
        acc_ref[...] = jnp.zeros_like(acc_ref)

    x = x_ref[...]                                           # bf16 MXU operand
    g = jnp.dot(x, wg_ref[...], preferred_element_type=jnp.float32)
    u = jnp.dot(x, wu_ref[...], preferred_element_type=jnp.float32)
    # silu(g) * u — exp on EUP, approx reciprocal on EUP (no VALU divide)
    h = (g * pl.reciprocal(1.0 + jnp.exp(-g), approx=True)) * u
    acc_ref[...] += jnp.dot(h.astype(wd_ref.dtype), wd_ref[...],
                            preferred_element_type=jnp.float32)

    @pl.when(j == pl.num_programs(1) - 1)
    def _done():
        o_ref[...] = acc_ref[...].astype(o_ref.dtype)


def fused_mlp(x, wg, wu, wd, *, tm=512, ti=1024):
    M, H = x.shape
    I = wg.shape[1]
    tm = _tile(M, tm, (16, 8))
    ti = _tile(I, ti, (256, 128))
    grid = (M // tm, I // ti)
    return pl.pallas_call(
        _mlp_kernel,
        out_shape=jax.ShapeDtypeStruct((M, H), x.dtype),
        grid=grid,
        in_specs=[
            pl.BlockSpec((tm, H), lambda i, j: (i, 0)),
            pl.BlockSpec((H, ti), lambda i, j: (0, j)),
            pl.BlockSpec((H, ti), lambda i, j: (0, j)),
            pl.BlockSpec((ti, H), lambda i, j: (j, 0)),
        ],
        out_specs=pl.BlockSpec((tm, H), lambda i, j: (i, 0)),
        scratch_shapes=[pltpu.VMEM((tm, H), jnp.float32)],
        compiler_params=pltpu.CompilerParams(
            dimension_semantics=("parallel", "arbitrary"),
            vmem_limit_bytes=VMEM_LIMIT),
    )(x, wg, wu, wd)


# ------------------------------------------------------------------
# Model glue (plain JAX)
# ------------------------------------------------------------------

def rotary_embedding(position_ids, head_dim, theta):
    """Returns cos (1,S,D) and a pre-signed sin table so rope(x) = x*cos + roll(x,D/2)*sin."""
    inv_freq = 1.0 / (theta ** (jnp.arange(0, head_dim, 2, dtype=jnp.float32) / head_dim))
    freqs = position_ids[:, :, None].astype(jnp.float32) * inv_freq[None, None, :]
    cos = jnp.cos(jnp.concatenate([freqs, freqs], axis=-1))
    sin = jnp.sin(freqs)
    sin_signed = jnp.concatenate([-sin, sin], axis=-1)       # rotate-half sign folded in
    return cos, sin_signed


def init_params(key, cfg):
    H = cfg["hidden_size"]
    I = cfg["intermediate_size"]
    nH = cfg["num_heads"]
    nKV = cfg["num_kv_heads"]
    D = cfg["head_dim"]
    V = cfg["vocab_size"]
    assert H == nH * D

    def nrm(k, shape, scale=0.02):
        return (scale * jax.random.normal(k, shape, jnp.float32)).astype(PARAM_DTYPE)

    ks = iter(jax.random.split(key, 2 + 5 * cfg["num_layers"]))
    # All projection weights stored pre-transposed (K_in, N_out) — free at load time,
    # gives the MXU an output-lane-major RHS tile.
    params = {
        "embed": nrm(next(ks), (V, H)),
        "lm_head": nrm(next(ks), (H, V)),
        "norm": jnp.ones((H,), PARAM_DTYPE),
        "layers": [],
    }
    for _ in range(cfg["num_layers"]):
        params["layers"].append({
            "attn_norm": jnp.ones((H,), PARAM_DTYPE),
            "ffn_norm": jnp.ones((H,), PARAM_DTYPE),
            # fused q|k|v projection weight (heads packed q0..q{nH-1}, k0.., v0.. along N)
            "wqkv": nrm(next(ks), (H, (nH + 2 * nKV) * D)),
            "wo": nrm(next(ks), (H, H)),
            "wg": nrm(next(ks), (H, I)),
            "wu": nrm(next(ks), (H, I)),
            "wd": nrm(next(ks), (I, H)),
        })
    return params


def llama_forward(params, input_ids, start_pos, cfg):
    B, S = input_ids.shape
    H, nH, nKV = cfg["hidden_size"], cfg["num_heads"], cfg["num_kv_heads"]
    D, V = cfg["head_dim"], cfg["vocab_size"]

    # embedding gather (glue)
    h = jnp.take(params["embed"], input_ids, axis=0)          # (B, S, H)

    position_ids = jnp.arange(start_pos, start_pos + S)[None, :]
    cos, sin_signed = rotary_embedding(position_ids, D, cfg["rope_theta"])   # (1, S, D) f32

    # seq_len > 1 => context path: qk_scale carries log2(e) for the exp2 softmax
    qk_scale = (1.0 / math.sqrt(D)) * LOG2E

    residual = None
    for lp in params["layers"]:
        x_norm, residual = skip_rmsnorm(h, residual, lp["attn_norm"], cfg["eps"])
        x2 = x_norm.reshape(B * S, H)

        # fused Q|K|V projection
        qkv = linear(x2, lp["wqkv"]).reshape(B, S, (nH + 2 * nKV) * D)
        # RoPE applied once + relayout to head-major (contiguous K/V slabs for attention)
        qkv_hm = rope_and_split_heads(qkv, cos, sin_signed, nH, nKV, D)
        # TODO(synk): update_kv_buffer (KV-cache writeback) omitted — it is a cache
        # side-effect and does not affect the prefill forward output.

        attn = attention(qkv_hm, nH, nKV, D, qk_scale)         # (B, S, nH*D)
        attn_out = linear(attn.reshape(B * S, H), lp["wo"]).reshape(B, S, H)

        x_norm2, residual = skip_rmsnorm(attn_out, residual, lp["ffn_norm"], cfg["eps"])
        h = fused_mlp(x_norm2.reshape(B * S, H),
                      lp["wg"], lp["wu"], lp["wd"]).reshape(B, S, H)

    h_final, _ = skip_rmsnorm(h, residual, params["norm"], cfg["eps"])
    logits = linear(h_final.reshape(B * S, H), params["lm_head"],
                    out_dtype=jnp.float32).reshape(B, S, V)
    return logits


if __name__ == "__main__":
    cfg = dict(
        vocab_size=1024,
        hidden_size=256,        # = num_heads * head_dim
        num_heads=2,
        num_kv_heads=1,
        head_dim=128,           # lane-dense head dimension
        intermediate_size=1024,
        num_layers=2,
        eps=1e-6,
        rope_theta=10000.0,
    )
    key = jax.random.PRNGKey(0)
    pkey, ikey = jax.random.split(key)
    params = init_params(pkey, cfg)

    B, S = 2, 128
    input_ids = jax.random.randint(ikey, (B, S), 0, cfg["vocab_size"])

    logits = llama_forward(params, input_ids, start_pos=0, cfg=cfg)
    jax.block_until_ready(logits)
    assert logits.shape == (B, S, cfg["vocab_size"])
    assert bool(jnp.all(jnp.isfinite(logits.astype(jnp.float32))))
    print("KERNEL_OK")
</pallas_src>

<mosaic_0001>
module attributes {stable_mosaic.version = 11 : i64} {
  func.func @_rmsnorm_kernel(%arg0: i32, %arg1: memref<256x256xbf16, #tpu.memory_space<vmem>>, %arg2: memref<1x256xbf16, #tpu.memory_space<vmem>>, %arg3: memref<256x256xbf16, #tpu.memory_space<vmem>>) attributes {dimension_semantics = [#tpu.dimension_semantics<parallel>], iteration_bounds = array<i64: 1>, scalar_prefetch = 0 : i64, scratch_operands = 0 : i64, tpu.core_type = #tpu.core_type<tc>, window_params = [{transform_indices = @transform_0, window_bounds = array<i64: 256, 256>}, {pipeline_mode = #tpu.pipeline_mode<synchronous>, transform_indices = @transform_1, window_bounds = array<i64: 1, 256>}, {transform_indices = @transform_2, window_bounds = array<i64: 256, 256>}]} {
    %c0 = arith.constant 0 : index
    %c0_0 = arith.constant 0 : index
    %0 = vector.load %arg1[%c0, %c0_0] : memref<256x256xbf16, #tpu.memory_space<vmem>>, vector<256x256xbf16>
    %1 = arith.extf %0 : vector<256x256xbf16> to vector<256x256xf32>
    %2 = arith.mulf %1, %1 : vector<256x256xf32>
    %cst = arith.constant dense<0.000000e+00> : vector<256xf32>
    %3 = vector.multi_reduction <add>, %2, %cst [1] : vector<256x256xf32> to vector<256xf32>
    %4 = vector.shape_cast %3 : vector<256xf32> to vector<256x1xf32>
    %cst_1 = arith.constant 2.560000e+02 : f32
    %5 = vector.broadcast %cst_1 : f32 to vector<256x1xf32>
    %6 = arith.divf %4, %5 : vector<256x1xf32>
    %cst_2 = arith.constant 9.99999997E-7 : f32
    %7 = vector.broadcast %cst_2 : f32 to vector<256x1xf32>
    %8 = arith.addf %6, %7 : vector<256x1xf32>
    %9 = math.rsqrt %8 : vector<256x1xf32>
    %10 = vector.broadcast %9 : vector<256x1xf32> to vector<256x256xf32>
    %11 = arith.mulf %1, %10 : vector<256x256xf32>
    %c0_3 = arith.constant 0 : index
    %c0_4 = arith.constant 0 : index
    %12 = vector.load %arg2[%c0_3, %c0_4] : memref<1x256xbf16, #tpu.memory_space<vmem>>, vector<1x256xbf16>
    %13 = arith.extf %12 : vector<1x256xbf16> to vector<1x256xf32>
    %14 = vector.broadcast %13 : vector<1x256xf32> to vector<256x256xf32>
    %15 = arith.mulf %11, %14 : vector<256x256xf32>
    %16 = arith.truncf %15 : vector<256x256xf32> to vector<256x256xbf16>
    %c0_5 = arith.constant 0 : index
    %c0_6 = arith.constant 0 : index
    %17 = vector.load %arg3[%c0_5, %c0_6] : memref<256x256xbf16, #tpu.memory_space<vmem>>, vector<256x256xbf16>
    tpu.vector_store %arg3[%c0_5, %c0_6], %16 {strides = array<i32>} : memref<256x256xbf16, #tpu.memory_space<vmem>>, vector<256x256xbf16>,
    return
  }
  func.func @transform_0(%arg0: i32) -> (i32, i32) {
    %c0_i32 = arith.constant 0 : i32
    %c0_i32_0 = arith.constant 0 : i32
    return %arg0, %c0_i32 : i32, i32
  }
  func.func @transform_1(%arg0: i32) -> (i32, i32) {
    %c0_i32 = arith.constant 0 : i32
    %c0_i32_0 = arith.constant 0 : i32
    %c0_i32_1 = arith.constant 0 : i32
    return %c0_i32, %c0_i32_0 : i32, i32
  }
  func.func @transform_2(%arg0: i32) -> (i32, i32) {
    %c0_i32 = arith.constant 0 : i32
    %c0_i32_0 = arith.constant 0 : i32
    return %arg0, %c0_i32 : i32, i32
  }
}

</mosaic_0001>

<llo_original>
// kernel: tpu_custom_call.1
$region0: #{tpu_custom_call.1}
  #allocation0 [shape = 'u32[]', space=smem, size = 0x4, offset = 0x4, fixed_abs, tag = 'smem constant byte address 0x4 - core index']
  #allocation1 [shape = 'u32[144,128]{1,0:T(1,128)}', space=vmem, size = 0x12000, scoped, tag = 'internal scratch']
  %s0 = inlined_call_operand.hbm [shape: bf16[256,256], index: 0, kind: input, shape index: {}]
  %s1 = inlined_call_operand.hbm [shape: bf16[1,256], index: 1, kind: input, shape index: {}]
  %s2 = inlined_call_operand.hbm [shape: bf16[256,256], index: 2, kind: output, shape index: {}]
  %s3 = sld [smem:[#allocation0]]
  $region26: #{tpu_custom_call.1} parent=0
    _
  %s5 = ssub.s32 1, %s3
  %s6 = scalar_select 0, %s5, %s3
  $region1: #{tpu_custom_call.1} parent=0
    #allocation2 [shape = 'u8[131072]{0}', space=vmem, size = 0x20000, scoped, tag = 'input window, operand 0, single buffered']
    #allocation3 [shape = 's32[1]{0}', space=sflag, size = 0x4, scoped, tag = 'scoped memory for tpu_custom_call.1']
    #allocation4 [shape = 's32[1]{0}', space=sflag, size = 0x4, scoped, tag = 'scoped memory for tpu_custom_call.1']
    #allocation5 [shape = 'u8[1024]{0}', space=vmem, size = 0x400, scoped, tag = 'input window, operand 1, single buffered']
    #allocation6 [shape = 's32[1]{0}', space=sflag, size = 0x4, scoped, tag = 'scoped memory for tpu_custom_call.1']
    #allocation7 [shape = 'u8[131072]{0}', space=vmem, size = 0x20000, scoped, tag = 'output window, operand 0, single buffered']
    %7 = vsyncpa [#allocation3], 0
    %8 = vsyncpa [#allocation6], 0
    %9 = vsyncpa [#allocation4], 0
    // Predicated region
    $region2: #{tpu_custom_call.1} parent=1 // pred_check
      _
    $region3: #{tpu_custom_call.1} parent=1 // pred_check_branch
      %11 = sbr.rel (0) target = $region5
    $region4: #{tpu_custom_call.1} parent=1 // pred_region
      %s13 = ssub.s32 4096, 4096
      %14 = vsyncadd [#allocation3], %s13
      %s15 = sshll.u32 [#allocation2], 4
      %s16 = int_to_ptr.vmem [resolvable:$true] %s15
      %21 = dma.hbm_to_vmem [thread:$0]  %s0, 4096, %s16, [#allocation3], 128, 128, 8
    $region5: #{tpu_custom_call.1} parent=1 // pred_fallthru
      _
    // Predicated region
    $region6: #{tpu_custom_call.1} parent=1 // pred_check
      _
    $region7: #{tpu_custom_call.1} parent=1 // pred_check_branch
      %23 = sbr.rel (0) target = $region9
    $region8: #{tpu_custom_call.1} parent=1 // pred_region
      %s25 = ssub.s32 32, 32
      %26 = vsyncadd [#allocation6], %s25
      %s28 = sshll.u32 [#allocation5], 4
      %s29 = int_to_ptr.vmem [resolvable:$true] %s28
      %31 = dma.hbm_to_vmem [thread:$0]  %s1, 32, %s29, [#allocation6]
    $region9: #{tpu_custom_call.1} parent=1 // pred_fallthru
      _
    // Predicated region
    $region10: #{tpu_custom_call.1} parent=1 // pred_check
      _
    $region11: #{tpu_custom_call.1} parent=1 // pred_check_branch
      %33 = sbr.rel (0) target = $region13
    $region12: #{tpu_custom_call.1} parent=1 // pred_region
      %34 = dma.done [#allocation3], 4096
    $region13: #{tpu_custom_call.1} parent=1 // pred_fallthru
      _
    // Predicated region
    $region14: #{tpu_custom_call.1} parent=1 // pred_check
      _
    $region15: #{tpu_custom_call.1} parent=1 // pred_check_branch
      %36 = sbr.rel (0) target = $region17
    $region16: #{tpu_custom_call.1} parent=1 // pred_region
      %37 = dma.done [#allocation6], 32
    $region17: #{tpu_custom_call.1} parent=1 // pred_fallthru
      _
    %v38 = vld [vmem:[#allocation2] sm:$0xff]
    %v39 = vld [vmem:[#allocation2 + $0x8] sm:$0xff]
    %v40 = vld [vmem:[#allocation2 + $0x10] sm:$0xff]
    %v41 = vld [vmem:[#allocation2 + $0x18] sm:$0xff]
    %v42 = vld [vmem:[#allocation2 + $0x20] sm:$0xff]
    %v43 = vld [vmem:[#allocation2 + $0x28] sm:$0xff]
    %v44 = vld [vmem:[#allocation2 + $0x30] sm:$0xff]
    %v45 = vld [vmem:[#allocation2 + $0x38] sm:$0xff]
    %v46 = vld [vmem:[#allocation2 + $0x40] sm:$0xff]
    %v47 = vld [vmem:[#allocation2 + $0x48] sm:$0xff]
    %v48 = vld [vmem:[#allocation2 + $0x50] sm:$0xff]
    %v49 = vld [vmem:[#allocation2 + $0x58] sm:$0xff]
    %v50 = vld [vmem:[#allocation2 + $0x60] sm:$0xff]
    %v51 = vld [vmem:[#allocation2 + $0x68] sm:$0xff]
    %v52 = vld [vmem:[#allocation2 + $0x70] sm:$0xff]
    %v53 = vld [vmem:[#allocation2 + $0x78] sm:$0xff]
    %v54 = vld [vmem:[#allocation2 + $0x80] sm:$0xff]
    %v55 = vld [vmem:[#allocation2 + $0x88] sm:$0xff]
    %v56 = vld [vmem:[#allocation2 + $0x90] sm:$0xff]
    %v57 = vld [vmem:[#allocation2 + $0x98] sm:$0xff]
    %v58 = vld [vmem:[#allocation2 + $0xa0] sm:$0xff]
    %v59 = vld [vmem:[#allocation2 + $0xa8] sm:$0xff]
    %v60 = vld [vmem:[#allocation2 + $0xb0] sm:$0xff]
    %v61 = vld [vmem:[#allocation2 + $0xb8] sm:$0xff]
    %v62 = vld [vmem:[#allocation2 + $0xc0] sm:$0xff]
    %v63 = vld [vmem:[#allocation2 + $0xc8] sm:$0xff]
    %v64 = vld [vmem:[#allocation2 + $0xd0] sm:$0xff]
    %v65 = vld [vmem:[#allocation2 + $0xd8] sm:$0xff]
    %v66 = vld [vmem:[#allocation2 + $0xe0] sm:$0xff]
    %v67 = vld [vmem:[#allocation2 + $0xe8] sm:$0xff]
    %v68 = vld [vmem:[#allocation2 + $0xf0] sm:$0xff]
    %v69 = vld [vmem:[#allocation2 + $0xf8] sm:$0xff]
    %v70 = vunpack.c.l.bf16 %v38
    %v71 = vunpack.c.h.bf16 %v38
    %v72 = vunpack.c.l.bf16 %v39
    %v73 = vunpack.c.h.bf16 %v39
    %v74 = vunpack.c.l.bf16 %v40
    %v75 = vunpack.c.h.bf16 %v40
    %v76 = vunpack.c.l.bf16 %v41
    %v77 = vunpack.c.h.bf16 %v41
    %v78 = vunpack.c.l.bf16 %v42
    %v79 = vunpack.c.h.bf16 %v42
    %v80 = vunpack.c.l.bf16 %v43
    %v81 = vunpack.c.h.bf16 %v43
    %v82 = vunpack.c.l.bf16 %v44
    %v83 = vunpack.c.h.bf16 %v44
    %v84 = vunpack.c.l.bf16 %v45
    %v85 = vunpack.c.h.bf16 %v45
    %v86 = vunpack.c.l.bf16 %v46
    %v87 = vunpack.c.h.bf16 %v46
    %v88 = vunpack.c.l.bf16 %v47
    %v89 = vunpack.c.h.bf16 %v47
    %v90 = vunpack.c.l.bf16 %v48
    %v91 = vunpack.c.h.bf16 %v48
    %v92 = vunpack.c.l.bf16 %v49
    %v93 = vunpack.c.h.bf16 %v49
    %v94 = vunpack.c.l.bf16 %v50
    %v95 = vunpack.c.h.bf16 %v50
    %v96 = vunpack.c.l.bf16 %v51
    %v97 = vunpack.c.h.bf16 %v51
    %v98 = vunpack.c.l.bf16 %v52
    %v99 = vunpack.c.h.bf16 %v52
    %v100 = vunpack.c.l.bf16 %v53
    %v101 = vunpack.c.h.bf16 %v53
    %v102 = vunpack.c.l.bf16 %v54
    %v103 = vunpack.c.h.bf16 %v54
    %v104 = vunpack.c.l.bf16 %v55
    %v105 = vunpack.c.h.bf16 %v55
    %v106 = vunpack.c.l.bf16 %v56
    %v107 = vunpack.c.h.bf16 %v56
    %v108 = vunpack.c.l.bf16 %v57
    %v109 = vunpack.c.h.bf16 %v57
    %v110 = vunpack.c.l.bf16 %v58
    %v111 = vunpack.c.h.bf16 %v58
    %v112 = vunpack.c.l.bf16 %v59
    %v113 = vunpack.c.h.bf16 %v59
    %v114 = vunpack.c.l.bf16 %v60
    %v115 = vunpack.c.h.bf16 %v60
    %v116 = vunpack.c.l.bf16 %v61
    %v117 = vunpack.c.h.bf16 %v61
    %v118 = vunpack.c.l.bf16 %v62
    %v119 = vunpack.c.h.bf16 %v62
    %v120 = vunpack.c.l.bf16 %v63
    %v121 = vunpack.c.h.bf16 %v63
    %v122 = vunpack.c.l.bf16 %v64
    %v123 = vunpack.c.h.bf16 %v64
    %v124 = vunpack.c.l.bf16 %v65
    %v125 = vunpack.c.h.bf16 %v65
    %v126 = vunpack.c.l.bf16 %v66
    %v127 = vunpack.c.h.bf16 %v66
    %v128 = vunpack.c.l.bf16 %v67
    %v129 = vunpack.c.h.bf16 %v67
    %v130 = vunpack.c.l.bf16 %v68
    %v131 = vunpack.c.h.bf16 %v68
    %v132 = vunpack.c.l.bf16 %v69
    %v133 = vunpack.c.h.bf16 %v69
    %v134 = vmul.f32 %v70, %v70
    %v135 = vmul.f32 %v71, %v71
    %v136 = vmul.f32 %v72, %v72
    %v137 = vmul.f32 %v73, %v73
    %v138 = vmul.f32 %v74, %v74
    %v139 = vmul.f32 %v75, %v75
    %v140 = vmul.f32 %v76, %v76
    %v141 = vmul.f32 %v77, %v77
    %v142 = vmul.f32 %v78, %v78
    %v143 = vmul.f32 %v79, %v79
    %v144 = vmul.f32 %v80, %v80
    %v145 = vmul.f32 %v81, %v81
    %v146 = vmul.f32 %v82, %v82
    %v147 = vmul.f32 %v83, %v83
    %v148 = vmul.f32 %v84, %v84
    %v149 = vmul.f32 %v85, %v85
    %v150 = vmul.f32 %v86, %v86
    %v151 = vmul.f32 %v87, %v87
    %v152 = vmul.f32 %v88, %v88
    %v153 = vmul.f32 %v89, %v89
    %v154 = vmul.f32 %v90, %v90
    %v155 = vmul.f32 %v91, %v91
    %v156 = vmul.f32 %v92, %v92
    %v157 = vmul.f32 %v93, %v93
    %v158 = vmul.f32 %v94, %v94
    %v159 = vmul.f32 %v95, %v95
    %v160 = vmul.f32 %v96, %v96
    %v161 = vmul.f32 %v97, %v97
    %v162 = vmul.f32 %v98, %v98
    %v163 = vmul.f32 %v99, %v99
    %v164 = vmul.f32 %v100, %v100
    %v165 = vmul.f32 %v101, %v101
    %v166 = vmul.f32 %v102, %v102
    %v167 = vmul.f32 %v103, %v103
    %v168 = vmul.f32 %v104, %v104
    %v169 = vmul.f32 %v105, %v105
    %v170 = vmul.f32 %v106, %v106
    %v171 = vmul.f32 %v107, %v107
    %v172 = vmul.f32 %v108, %v108
    %v173 = vmul.f32 %v109, %v109
    %v174 = vmul.f32 %v110, %v110
    %v175 = vmul.f32 %v111, %v111
    %v176 = vmul.f32 %v112, %v112
    %v177 = vmul.f32 %v113, %v113
    %v178 = vmul.f32 %v114, %v114
    %v179 = vmul.f32 %v115, %v115
    %v180 = vmul.f32 %v116, %v116
    %v181 = vmul.f32 %v117, %v117
    %v182 = vmul.f32 %v118, %v118
    %v183 = vmul.f32 %v119, %v119
    %v184 = vmul.f32 %v120, %v120
    %v185 = vmul.f32 %v121, %v121
    %v186 = vmul.f32 %v122, %v122
    %v187 = vmul.f32 %v123, %v123
    %v188 = vmul.f32 %v124, %v124
    %v189 = vmul.f32 %v125, %v125
    %v190 = vmul.f32 %v126, %v126
    %v191 = vmul.f32 %v127, %v127
    %v192 = vmul.f32 %v128, %v128
    %v193 = vmul.f32 %v129, %v129
    %v194 = vmul.f32 %v130, %v130
    %v195 = vmul.f32 %v131, %v131
    %v196 = vmul.f32 %v132, %v132
    %v197 = vmul.f32 %v133, %v133
    %v198 = vadd.f32 %v134, %v135
    %199 = vadd.xlane.f32.xlu0 %v198
    %v200 = vpop.xlane.xlu0 %199
    %v201 = vadd.f32 %v136, %v137
    %202 = vadd.xlane.f32.xlu0 %v201
    %v203 = vpop.xlane.xlu0 %202
    %v204 = vadd.f32 %v138, %v139
    %205 = vadd.xlane.f32.xlu0 %v204
    %v206 = vpop.xlane.xlu0 %205
    %v207 = vadd.f32 %v140, %v141
    %208 = vadd.xlane.f32.xlu0 %v207
    %v209 = vpop.xlane.xlu0 %208
    %v210 = vadd.f32 %v142, %v143
    %211 = vadd.xlane.f32.xlu0 %v210
    %v212 = vpop.xlane.xlu0 %211
    %v213 = vadd.f32 %v144, %v145
    %214 = vadd.xlane.f32.xlu0 %v213
    %v215 = vpop.xlane.xlu0 %214
    %v216 = vadd.f32 %v146, %v147
    %217 = vadd.xlane.f32.xlu0 %v216
    %v218 = vpop.xlane.xlu0 %217
    %v219 = vadd.f32 %v148, %v149
    %220 = vadd.xlane.f32.xlu0 %v219
    %v221 = vpop.xlane.xlu0 %220
    %v222 = vadd.f32 %v150, %v151
    %223 = vadd.xlane.f32.xlu0 %v222
    %v224 = vpop.xlane.xlu0 %223
    %v225 = vadd.f32 %v152, %v153
    %226 = vadd.xlane.f32.xlu0 %v225
    %v227 = vpop.xlane.xlu0 %226
    %v228 = vadd.f32 %v154, %v155
    %229 = vadd.xlane.f32.xlu0 %v228
    %v230 = vpop.xlane.xlu0 %229
    %v231 = vadd.f32 %v156, %v157
    %232 = vadd.xlane.f32.xlu0 %v231
    %v233 = vpop.xlane.xlu0 %232
    %v234 = vadd.f32 %v158, %v159
    %235 = vadd.xlane.f32.xlu0 %v234
    %v236 = vpop.xlane.xlu0 %235
    %v237 = vadd.f32 %v160, %v161
    %238 = vadd.xlane.f32.xlu0 %v237
    %v239 = vpop.xlane.xlu0 %238
    %v240 = vadd.f32 %v162, %v163
    %241 = vadd.xlane.f32.xlu0 %v240
    %v242 = vpop.xlane.xlu0 %241
    %v243 = vadd.f32 %v164, %v165
    %244 = vadd.xlane.f32.xlu0 %v243
    %v245 = vpop.xlane.xlu0 %244
    %v246 = vadd.f32 %v166, %v167
    %247 = vadd.xlane.f32.xlu0 %v246
    %v248 = vpop.xlane.xlu0 %247
    %v249 = vadd.f32 %v168, %v169
    %250 = vadd.xlane.f32.xlu0 %v249
    %v251 = vpop.xlane.xlu0 %250
    %v252 = vadd.f32 %v170, %v171
    %253 = vadd.xlane.f32.xlu0 %v252
    %v254 = vpop.xlane.xlu0 %253
    %v255 = vadd.f32 %v172, %v173
    %256 = vadd.xlane.f32.xlu0 %v255
    %v257 = vpop.xlane.xlu0 %256
    %v258 = vadd.f32 %v174, %v175
    %259 = vadd.xlane.f32.xlu0 %v258
    %v260 = vpop.xlane.xlu0 %259
    %v261 = vadd.f32 %v176, %v177
    %262 = vadd.xlane.f32.xlu0 %v261
    %v263 = vpop.xlane.xlu0 %262
    %v264 = vadd.f32 %v178, %v179
    %265 = vadd.xlane.f32.xlu0 %v264
    %v266 = vpop.xlane.xlu0 %265
    %v267 = vadd.f32 %v180, %v181
    %268 = vadd.xlane.f32.xlu0 %v267
    %v269 = vpop.xlane.xlu0 %268
    %v270 = vadd.f32 %v182, %v183
    %271 = vadd.xlane.f32.xlu0 %v270
    %v272 = vpop.xlane.xlu0 %271
    %v273 = vadd.f32 %v184, %v185
    %274 = vadd.xlane.f32.xlu0 %v273
    %v275 = vpop.xlane.xlu0 %274
    %v276 = vadd.f32 %v186, %v187
    %277 = vadd.xlane.f32.xlu0 %v276
    %v278 = vpop.xlane.xlu0 %277
    %v279 = vadd.f32 %v188, %v189
    %280 = vadd.xlane.f32.xlu0 %v279
    %v281 = vpop.xlane.xlu0 %280
    %v282 = vadd.f32 %v190, %v191
    %283 = vadd.xlane.f32.xlu0 %v282
    %v284 = vpop.xlane.xlu0 %283
    %v285 = vadd.f32 %v192, %v193
    %286 = vadd.xlane.f32.xlu0 %v285
    %v287 = vpop.xlane.xlu0 %286
    %v288 = vadd.f32 %v194, %v195
    %289 = vadd.xlane.f32.xlu0 %v288
    %v290 = vpop.xlane.xlu0 %289
    %v291 = vadd.f32 %v196, %v197
    %292 = vadd.xlane.f32.xlu0 %v291
    %v293 = vpop.xlane.xlu0 %292
    %v294 = vrcp.pop 256.0
    %v295 = vmul.f32 %v200, %v294
    %v296 = vmul.f32 %v203, %v294
    %v297 = vmul.f32 %v206, %v294
    %v298 = vmul.f32 %v209, %v294
    %v299 = vmul.f32 %v212, %v294
    %v300 = vmul.f32 %v215, %v294
    %v301 = vmul.f32 %v218, %v294
    %v302 = vmul.f32 %v221, %v294
    %v303 = vmul.f32 %v224, %v294
    %v304 = vmul.f32 %v227, %v294
    %v305 = vmul.f32 %v230, %v294
    %v306 = vmul.f32 %v233, %v294
    %v307 = vmul.f32 %v236, %v294
    %v308 = vmul.f32 %v239, %v294
    %v309 = vmul.f32 %v242, %v294
    %v310 = vmul.f32 %v245, %v294
    %v311 = vmul.f32 %v248, %v294
    %v312 = vmul.f32 %v251, %v294
    %v313 = vmul.f32 %v254, %v294
    %v314 = vmul.f32 %v257, %v294
    %v315 = vmul.f32 %v260, %v294
    %v316 = vmul.f32 %v263, %v294
    %v317 = vmul.f32 %v266, %v294
    %v318 = vmul.f32 %v269, %v294
    %v319 = vmul.f32 %v272, %v294
    %v320 = vmul.f32 %v275, %v294
    %v321 = vmul.f32 %v278, %v294
    %v322 = vmul.f32 %v281, %v294
    %v323 = vmul.f32 %v284, %v294
    %v324 = vmul.f32 %v287, %v294
    %v325 = vmul.f32 %v290, %v294
    %v326 = vmul.f32 %v293, %v294
    %v327 = vadd.f32 %v295, 1e-06
    %v328 = vadd.f32 %v296, 1e-06
    %v329 = vadd.f32 %v297, 1e-06
    %v330 = vadd.f32 %v298, 1e-06
    %v331 = vadd.f32 %v299, 1e-06
    %v332 = vadd.f32 %v300, 1e-06
    %v333 = vadd.f32 %v301, 1e-06
    %v334 = vadd.f32 %v302, 1e-06
    %v335 = vadd.f32 %v303, 1e-06
    %v336 = vadd.f32 %v304, 1e-06
    %v337 = vadd.f32 %v305, 1e-06
    %v338 = vadd.f32 %v306, 1e-06
    %v339 = vadd.f32 %v307, 1e-06
    %v340 = vadd.f32 %v308, 1e-06
    %v341 = vadd.f32 %v309, 1e-06
    %v342 = vadd.f32 %v310, 1e-06
    %v343 = vadd.f32 %v311, 1e-06
    %v344 = vadd.f32 %v312, 1e-06
    %v345 = vadd.f32 %v313, 1e-06
    %v346 = vadd.f32 %v314, 1e-06
    %v347 = vadd.f32 %v315, 1e-06
    %v348 = vadd.f32 %v316, 1e-06
    %v349 = vadd.f32 %v317, 1e-06
    %v350 = vadd.f32 %v318, 1e-06
    %v351 = vadd.f32 %v319, 1e-06
    %v352 = vadd.f32 %v320, 1e-06
    %v353 = vadd.f32 %v321, 1e-06
    %v354 = vadd.f32 %v322, 1e-06
    %v355 = vadd.f32 %v323, 1e-06
    %v356 = vadd.f32 %v324, 1e-06
    %v357 = vadd.f32 %v325, 1e-06
    %v358 = vadd.f32 %v326, 1e-06
    %v359 = vrsqrt.pop %v327
    %v360 = vrsqrt.pop %v328
    %v361 = vrsqrt.pop %v329
    %v362 = vrsqrt.pop %v330
    %v363 = vrsqrt.pop %v331
    %v364 = vrsqrt.pop %v332
    %v365 = vrsqrt.pop %v333
    %v366 = vrsqrt.pop %v334
    %v367 = vrsqrt.pop %v335
    %v368 = vrsqrt.pop %v336
    %v369 = vrsqrt.pop %v337
    %v370 = vrsqrt.pop %v338
    %v371 = vrsqrt.pop %v339
    %v372 = vrsqrt.pop %v340
    %v373 = vrsqrt.pop %v341
    %v374 = vrsqrt.pop %v342
    %v375 = vrsqrt.pop %v343
    %v376 = vrsqrt.pop %v344
    %v377 = vrsqrt.pop %v345
    %v378 = vrsqrt.pop %v346
    %v379 = vrsqrt.pop %v347
    %v380 = vrsqrt.pop %v348
    %v381 = vrsqrt.pop %v349
    %v382 = vrsqrt.pop %v350
    %v383 = vrsqrt.pop %v351
    %v384 = vrsqrt.pop %v352
    %v385 = vrsqrt.pop %v353
    %v386 = vrsqrt.pop %v354
    %v387 = vrsqrt.pop %v355
    %v388 = vrsqrt.pop %v356
    %v389 = vrsqrt.pop %v357
    %v390 = vrsqrt.pop %v358
    %v391 = vmul.f32 %v70, %v359
    %v392 = vmul.f32 %v71, %v359
    %v393 = vmul.f32 %v72, %v360
    %v394 = vmul.f32 %v73, %v360
    %v395 = vmul.f32 %v74, %v361
    %v396 = vmul.f32 %v75, %v361
    %v397 = vmul.f32 %v76, %v362
    %v398 = vmul.f32 %v77, %v362
    %v399 = vmul.f32 %v78, %v363
    %v400 = vmul.f32 %v79, %v363
    %v401 = vmul.f32 %v80, %v364
    %v402 = vmul.f32 %v81, %v364
    %v403 = vmul.f32 %v82, %v365
    %v404 = vmul.f32 %v83, %v365
    %v405 = vmul.f32 %v84, %v366
    %v406 = vmul.f32 %v85, %v366
    %v407 = vmul.f32 %v86, %v367
    %v408 = vmul.f32 %v87, %v367
    %v409 = vmul.f32 %v88, %v368
    %v410 = vmul.f32 %v89, %v368
    %v411 = vmul.f32 %v90, %v369
    %v412 = vmul.f32 %v91, %v369
    %v413 = vmul.f32 %v92, %v370
    %v414 = vmul.f32 %v93, %v370
    %v415 = vmul.f32 %v94, %v371
    %v416 = vmul.f32 %v95, %v371
    %v417 = vmul.f32 %v96, %v372
    %v418 = vmul.f32 %v97, %v372
    %v419 = vmul.f32 %v98, %v373
    %v420 = vmul.f32 %v99, %v373
    %v421 = vmul.f32 %v100, %v374
    %v422 = vmul.f32 %v101, %v374
    %v423 = vmul.f32 %v102, %v375
    %v424 = vmul.f32 %v103, %v375
    %v425 = vmul.f32 %v104, %v376
    %v426 = vmul.f32 %v105, %v376
    %v427 = vmul.f32 %v106, %v377
    %v428 = vmul.f32 %v107, %v377
    %v429 = vmul.f32 %v108, %v378
    %v430 = vmul.f32 %v109, %v378
    %v431 = vmul.f32 %v110, %v379
    %v432 = vmul.f32 %v111, %v379
    %v433 = vmul.f32 %v112, %v380
    %v434 = vmul.f32 %v113, %v380
    %v435 = vmul.f32 %v114, %v381
    %v436 = vmul.f32 %v115, %v381
    %v437 = vmul.f32 %v116, %v382
    %v438 = vmul.f32 %v117, %v382
    %v439 = vmul.f32 %v118, %v383
    %v440 = vmul.f32 %v119, %v383
    %v441 = vmul.f32 %v120, %v384
    %v442 = vmul.f32 %v121, %v384
    %v443 = vmul.f32 %v122, %v385
    %v444 = vmul.f32 %v123, %v385
    %v445 = vmul.f32 %v124, %v386
    %v446 = vmul.f32 %v125, %v386
    %v447 = vmul.f32 %v126, %v387
    %v448 = vmul.f32 %v127, %v387
    %v449 = vmul.f32 %v128, %v388
    %v450 = vmul.f32 %v129, %v388
    %v451 = vmul.f32 %v130, %v389
    %v452 = vmul.f32 %v131, %v389
    %v453 = vmul.f32 %v132, %v390
    %v454 = vmul.f32 %v133, %v390
    %v455 = vld [vmem:[#allocation5] sm:$0x3]
    %v456 = vunpack.c.l.bf16 %v455
    %v458 = vlaneseq
    %v459 = vshrl.u32 %v458, 7
    %v460 = vsub.s32 0, %v459
    %v461 = vrot.slane %v456, %v460
    %v462 = vlaneseq
    %v463 = vshrl.u32 %v462, 7
    %v464 = vsub.s32 2, %v463
    %v465 = vrot.slane %v456, %v464
    %v468 = vlaneseq
    %v469 = vshrl.u32 %v468, 7
    %v470 = vsub.s32 0, %v469
    %v471 = vrot.slane %v461, %v470
    %v472 = vlaneseq
    %v473 = vshrl.u32 %v472, 7
    %v474 = vsub.s32 0, %v473
    %v475 = vrot.slane %v465, %v474
    %v476 = vmul.f32 %v391, %v471
    %v477 = vmul.f32 %v392, %v475
    %v478 = vmul.f32 %v393, %v471
    %v479 = vmul.f32 %v394, %v475
    %v480 = vmul.f32 %v395, %v471
    %v481 = vmul.f32 %v396, %v475
    %v482 = vmul.f32 %v397, %v471
    %v483 = vmul.f32 %v398, %v475
    %v484 = vmul.f32 %v399, %v471
    %v485 = vmul.f32 %v400, %v475
    %v486 = vmul.f32 %v401, %v471
    %v487 = vmul.f32 %v402, %v475
    %v488 = vmul.f32 %v403, %v471
    %v489 = vmul.f32 %v404, %v475
    %v490 = vmul.f32 %v405, %v471
    %v491 = vmul.f32 %v406, %v475
    %v492 = vmul.f32 %v407, %v471
    %v493 = vmul.f32 %v408, %v475
    %v494 = vmul.f32 %v409, %v471
    %v495 = vmul.f32 %v410, %v475
    %v496 = vmul.f32 %v411, %v471
    %v497 = vmul.f32 %v412, %v475
    %v498 = vmul.f32 %v413, %v471
    %v499 = vmul.f32 %v414, %v475
    %v500 = vmul.f32 %v415, %v471
    %v501 = vmul.f32 %v416, %v475
    %v502 = vmul.f32 %v417, %v471
    %v503 = vmul.f32 %v418, %v475
    %v504 = vmul.f32 %v419, %v471
    %v505 = vmul.f32 %v420, %v475
    %v506 = vmul.f32 %v421, %v471
    %v507 = vmul.f32 %v422, %v475
    %v508 = vmul.f32 %v423, %v471
    %v509 = vmul.f32 %v424, %v475
    %v510 = vmul.f32 %v425, %v471
    %v511 = vmul.f32 %v426, %v475
    %v512 = vmul.f32 %v427, %v471
    %v513 = vmul.f32 %v428, %v475
    %v514 = vmul.f32 %v429, %v471
    %v515 = vmul.f32 %v430, %v475
    %v516 = vmul.f32 %v431, %v471
    %v517 = vmul.f32 %v432, %v475
    %v518 = vmul.f32 %v433, %v471
    %v519 = vmul.f32 %v434, %v475
    %v520 = vmul.f32 %v435, %v471
    %v521 = vmul.f32 %v436, %v475
    %v522 = vmul.f32 %v437, %v471
    %v523 = vmul.f32 %v438, %v475
    %v524 = vmul.f32 %v439, %v471
    %v525 = vmul.f32 %v440, %v475
    %v526 = vmul.f32 %v441, %v471
    %v527 = vmul.f32 %v442, %v475
    %v528 = vmul.f32 %v443, %v471
    %v529 = vmul.f32 %v444, %v475
    %v530 = vmul.f32 %v445, %v471
    %v531 = vmul.f32 %v446, %v475
    %v532 = vmul.f32 %v447, %v471
    %v533 = vmul.f32 %v448, %v475
    %v534 = vmul.f32 %v449, %v471
    %v535 = vmul.f32 %v450, %v475
    %v536 = vmul.f32 %v451, %v471
    %v537 = vmul.f32 %v452, %v475
    %v538 = vmul.f32 %v453, %v471
    %v539 = vmul.f32 %v454, %v475
    %v540 = vpack.c.bf16 %v478, %v476
    %v541 = vpack.c.bf16 %v479, %v477
    %v542 = vpack.c.bf16 %v482, %v480
    %v543 = vpack.c.bf16 %v483, %v481
    %v544 = vpack.c.bf16 %v486, %v484
    %v545 = vpack.c.bf16 %v487, %v485
    %v546 = vpack.c.bf16 %v490, %v488
    %v547 = vpack.c.bf16 %v491, %v489
    %v548 = vpack.c.bf16 %v494, %v492
    %v549 = vpack.c.bf16 %v495, %v493
    %v550 = vpack.c.bf16 %v498, %v496
    %v551 = vpack.c.bf16 %v499, %v497
    %v552 = vpack.c.bf16 %v502, %v500
    %v553 = vpack.c.bf16 %v503, %v501
    %v554 = vpack.c.bf16 %v506, %v504
    %v555 = vpack.c.bf16 %v507, %v505
    %v556 = vpack.c.bf16 %v510, %v508
    %v557 = vpack.c.bf16 %v511, %v509
    %v558 = vpack.c.bf16 %v514, %v512
    %v559 = vpack.c.bf16 %v515, %v513
    %v560 = vpack.c.bf16 %v518, %v516
    %v561 = vpack.c.bf16 %v519, %v517
    %v562 = vpack.c.bf16 %v522, %v520
    %v563 = vpack.c.bf16 %v523, %v521
    %v564 = vpack.c.bf16 %v526, %v524
    %v565 = vpack.c.bf16 %v527, %v525
    %v566 = vpack.c.bf16 %v530, %v528
    %v567 = vpack.c.bf16 %v531, %v529
    %v568 = vpack.c.bf16 %v534, %v532
    %v569 = vpack.c.bf16 %v535, %v533
    %v570 = vpack.c.bf16 %v538, %v536
    %v571 = vpack.c.bf16 %v539, %v537
    %v604 = vunpack.c.l.b16 %v540
    %v605 = vunpack.c.l.b16 %v541
    %v606 = vunpack.c.h.b16 %v540
    %v607 = vunpack.c.h.b16 %v541
    %v608 = vunpack.c.l.b16 %v542
    %v609 = vunpack.c.l.b16 %v543
    %v610 = vunpack.c.h.b16 %v542
    %v611 = vunpack.c.h.b16 %v543
    %v612 = vunpack.c.l.b16 %v544
    %v613 = vunpack.c.l.b16 %v545
    %v614 = vunpack.c.h.b16 %v544
    %v615 = vunpack.c.h.b16 %v545
    %v616 = vunpack.c.l.b16 %v546
    %v617 = vunpack.c.l.b16 %v547
    %v618 = vunpack.c.h.b16 %v546
    %v619 = vunpack.c.h.b16 %v547
    %v620 = vunpack.c.l.b16 %v548
    %v621 = vunpack.c.l.b16 %v549
    %v622 = vunpack.c.h.b16 %v548
    %v623 = vunpack.c.h.b16 %v549
    %v624 = vunpack.c.l.b16 %v550
    %v625 = vunpack.c.l.b16 %v551
    %v626 = vunpack.c.h.b16 %v550
    %v627 = vunpack.c.h.b16 %v551
    %v628 = vunpack.c.l.b16 %v552
    %v629 = vunpack.c.l.b16 %v553
    %v630 = vunpack.c.h.b16 %v552
    %v631 = vunpack.c.h.b16 %v553
    %v632 = vunpack.c.l.b16 %v554
    %v633 = vunpack.c.l.b16 %v555
    %v634 = vunpack.c.h.b16 %v554
    %v635 = vunpack.c.h.b16 %v555
    %v636 = vunpack.c.l.b16 %v556
    %v637 = vunpack.c.l.b16 %v557
    %v638 = vunpack.c.h.b16 %v556
    %v639 = vunpack.c.h.b16 %v557
    %v640 = vunpack.c.l.b16 %v558
    %v641 = vunpack.c.l.b16 %v559
    %v642 = vunpack.c.h.b16 %v558
    %v643 = vunpack.c.h.b16 %v559
    %v644 = vunpack.c.l.b16 %v560
    %v645 = vunpack.c.l.b16 %v561
    %v646 = vunpack.c.h.b16 %v560
    %v647 = vunpack.c.h.b16 %v561
    %v648 = vunpack.c.l.b16 %v562
    %v649 = vunpack.c.l.b16 %v563
    %v650 = vunpack.c.h.b16 %v562
    %v651 = vunpack.c.h.b16 %v563
    %v652 = vunpack.c.l.b16 %v564
    %v653 = vunpack.c.l.b16 %v565
    %v654 = vunpack.c.h.b16 %v564
    %v655 = vunpack.c.h.b16 %v565
    %v656 = vunpack.c.l.b16 %v566
    %v657 = vunpack.c.l.b16 %v567
    %v658 = vunpack.c.h.b16 %v566
    %v659 = vunpack.c.h.b16 %v567
    %v660 = vunpack.c.l.b16 %v568
    %v661 = vunpack.c.l.b16 %v569
    %v662 = vunpack.c.h.b16 %v568
    %v663 = vunpack.c.h.b16 %v569
    %v664 = vunpack.c.l.b16 %v570
    %v665 = vunpack.c.l.b16 %v571
    %v666 = vunpack.c.h.b16 %v570
    %v667 = vunpack.c.h.b16 %v571
    %v668 = vpack.c.b16 %v605, %v604
    %v669 = vpack.c.b16 %v607, %v606
    %v670 = vpack.c.b16 %v609, %v608
    %v671 = vpack.c.b16 %v611, %v610
    %v672 = vpack.c.b16 %v613, %v612
    %v673 = vpack.c.b16 %v615, %v614
    %v674 = vpack.c.b16 %v617, %v616
    %v675 = vpack.c.b16 %v619, %v618
    %v676 = vpack.c.b16 %v621, %v620
    %v677 = vpack.c.b16 %v623, %v622
    %v678 = vpack.c.b16 %v625, %v624
    %v679 = vpack.c.b16 %v627, %v626
    %v680 = vpack.c.b16 %v629, %v628
    %v681 = vpack.c.b16 %v631, %v630
    %v682 = vpack.c.b16 %v633, %v632
    %v683 = vpack.c.b16 %v635, %v634
    %v684 = vpack.c.b16 %v637, %v636
    %v685 = vpack.c.b16 %v639, %v638
    %v686 = vpack.c.b16 %v641, %v640
    %v687 = vpack.c.b16 %v643, %v642
    %v688 = vpack.c.b16 %v645, %v644
    %v689 = vpack.c.b16 %v647, %v646
    %v690 = vpack.c.b16 %v649, %v648
    %v691 = vpack.c.b16 %v651, %v650
    %v692 = vpack.c.b16 %v653, %v652
    %v693 = vpack.c.b16 %v655, %v654
    %v694 = vpack.c.b16 %v657, %v656
    %v695 = vpack.c.b16 %v659, %v658
    %v696 = vpack.c.b16 %v661, %v660
    %v697 = vpack.c.b16 %v663, %v662
    %v698 = vpack.c.b16 %v665, %v664
    %v699 = vpack.c.b16 %v667, %v666
    %732 = vst [vmem:[#allocation7] sm:$0xff] %v668
    %733 = vst [vmem:[#allocation7 + $0x8] sm:$0xff] %v669
    %734 = vst [vmem:[#allocation7 + $0x10] sm:$0xff] %v670
    %735 = vst [vmem:[#allocation7 + $0x18] sm:$0xff] %v671
    %736 = vst [vmem:[#allocation7 + $0x20] sm:$0xff] %v672
    %737 = vst [vmem:[#allocation7 + $0x28] sm:$0xff] %v673
    %738 = vst [vmem:[#allocation7 + $0x30] sm:$0xff] %v674
    %739 = vst [vmem:[#allocation7 + $0x38] sm:$0xff] %v675
    %740 = vst [vmem:[#allocation7 + $0x40] sm:$0xff] %v676
    %741 = vst [vmem:[#allocation7 + $0x48] sm:$0xff] %v677
    %742 = vst [vmem:[#allocation7 + $0x50] sm:$0xff] %v678
    %743 = vst [vmem:[#allocation7 + $0x58] sm:$0xff] %v679
    %744 = vst [vmem:[#allocation7 + $0x60] sm:$0xff] %v680
    %745 = vst [vmem:[#allocation7 + $0x68] sm:$0xff] %v681
    %746 = vst [vmem:[#allocation7 + $0x70] sm:$0xff] %v682
    %747 = vst [vmem:[#allocation7 + $0x78] sm:$0xff] %v683
    %748 = vst [vmem:[#allocation7 + $0x80] sm:$0xff] %v684
    %749 = vst [vmem:[#allocation7 + $0x88] sm:$0xff] %v685
    %750 = vst [vmem:[#allocation7 + $0x90] sm:$0xff] %v686
    %751 = vst [vmem:[#allocation7 + $0x98] sm:$0xff] %v687
    %752 = vst [vmem:[#allocation7 + $0xa0] sm:$0xff] %v688
    %753 = vst [vmem:[#allocation7 + $0xa8] sm:$0xff] %v689
    %754 = vst [vmem:[#allocation7 + $0xb0] sm:$0xff] %v690
    %755 = vst [vmem:[#allocation7 + $0xb8] sm:$0xff] %v691
    %756 = vst [vmem:[#allocation7 + $0xc0] sm:$0xff] %v692
    %757 = vst [vmem:[#allocation7 + $0xc8] sm:$0xff] %v693
    %758 = vst [vmem:[#allocation7 + $0xd0] sm:$0xff] %v694
    %759 = vst [vmem:[#allocation7 + $0xd8] sm:$0xff] %v695
    %760 = vst [vmem:[#allocation7 + $0xe0] sm:$0xff] %v696
    %761 = vst [vmem:[#allocation7 + $0xe8] sm:$0xff] %v697
    %762 = vst [vmem:[#allocation7 + $0xf0] sm:$0xff] %v698
    %763 = vst [vmem:[#allocation7 + $0xf8] sm:$0xff] %v699
    // Predicated region
    $region18: #{tpu_custom_call.1} parent=1 // pred_check
      _
    $region19: #{tpu_custom_call.1} parent=1 // pred_check_branch
      %765 = sbr.rel (0) target = $region21
    $region20: #{tpu_custom_call.1} parent=1 // pred_region
      %s767 = ssub.s32 4096, 4096
      %768 = vsyncadd [#allocation4], %s767
      %s769 = sshll.u32 [#allocation7], 4
      %s770 = int_to_ptr.vmem [resolvable:$true] %s769
      %775 = dma.vmem_to_hbm [thread:$0]  %s770, 4096, %s2, [#allocation4], 128, 128, 8
    $region21: #{tpu_custom_call.1} parent=1 // pred_fallthru
      _
    // Predicated region
    $region22: #{tpu_custom_call.1} parent=1 // pred_check
      _
    $region23: #{tpu_custom_call.1} parent=1 // pred_check_branch
      %777 = sbr.rel (0) target = $region25
    $region24: #{tpu_custom_call.1} parent=1 // pred_region
      %778 = dma.done [#allocation4], 4096
    $region25: #{tpu_custom_call.1} parent=1 // pred_fallthru
      _
    %779 = vsyncpa [#allocation3], 1
    %780 = vsyncpa [#allocation6], 1
    %781 = vsyncpa [#allocation4], 1

</llo_original>
